<compile_context>
chip_gen: v7x
topology: tpu7x:2x2x1
jax: 0.10.0
libtpu: 0.0.40
codegen_flags: <defaults>
</compile_context>

<pallas_src>
import functools

import jax
import jax.numpy as jnp
from jax.experimental import pallas as pl
from jax.experimental.pallas import tpu as pltpu


# ---------------------------------------------------------------------------
# Kernel 1: tiled global average pool over the flattened spatial axis.
# ---------------------------------------------------------------------------
def _pool_mean_kernel(x_ref, o_ref, *, hw_total, hw_tile, inv_hw):
    # x_ref: (rows_tile, hw_tile)   o_ref: (rows_tile, 1) f32, resident across k
    k = pl.program_id(1)
    nk = pl.num_programs(1)

    x = x_ref[...].astype(jnp.float32)
    if hw_total % hw_tile != 0:
        # Mask lanes of the (padded) last chunk beyond the true H*W extent.
        lane = jax.lax.broadcasted_iota(jnp.int32, x.shape, 1)
        x = jnp.where(k * hw_tile + lane < hw_total, x, 0.0)

    partial_sum = jnp.sum(x, axis=-1, keepdims=True)  # (rows_tile, 1), XLU

    @pl.when(k == 0)
    def _():
        o_ref[...] = jnp.zeros_like(o_ref)

    o_ref[...] = o_ref[...] + partial_sum

    @pl.when(k == nk - 1)
    def _():
        o_ref[...] = o_ref[...] * inv_hw


# ---------------------------------------------------------------------------
# Kernel 2: tiny fc1 -> ReLU -> fc2 (-> sigmoid) MLP on the pooled (B, C).
# ---------------------------------------------------------------------------
def _se_mlp_kernel(y_ref, w1_ref, b1_ref, w2_ref, b2_ref, o_ref, *, apply_sigmoid):
    # y: (B, C) f32   w1: (C, Cr)  b1: (1, Cr)  w2: (Cr, C)  b2: (1, C)
    y = y_ref[...].astype(jnp.float32)
    h = jnp.dot(y, w1_ref[...].astype(jnp.float32),
                preferred_element_type=jnp.float32) + b1_ref[...].astype(jnp.float32)
    h = jnp.maximum(h, 0.0)
    z = jnp.dot(h, w2_ref[...].astype(jnp.float32),
                preferred_element_type=jnp.float32) + b2_ref[...].astype(jnp.float32)
    if apply_sigmoid:
        z = jax.nn.sigmoid(z)  # EUP
    o_ref[...] = z.astype(o_ref.dtype)


# ---------------------------------------------------------------------------
# Tile selection: (8,128)-aligned, ~4 MiB per input block (dtype-aware).
# ---------------------------------------------------------------------------
def _pick_tiles(BC, HW, itemsize, rows_tile_cap=None, hw_tile_cap=None):
    if rows_tile_cap is None:
        rows_tile_cap = 512
    if hw_tile_cap is None:
        # target ~4 MiB per block at rows_tile_cap rows
        hw_tile_cap = max(128, (4 * 1024 * 1024) // (rows_tile_cap * itemsize))
        hw_tile_cap = (hw_tile_cap // 128) * 128
    assert rows_tile_cap % 8 == 0 and hw_tile_cap % 128 == 0
    # Full extent if small (allowed even when not (8,128)-multiple), else cap.
    rows_tile = BC if BC <= rows_tile_cap else rows_tile_cap
    hw_tile = HW if HW <= hw_tile_cap else hw_tile_cap
    return rows_tile, hw_tile


# ---------------------------------------------------------------------------
# Wrapper
# ---------------------------------------------------------------------------
def attention_layer_forward(x, w1, b1, w2, b2, *, apply_sigmoid=True,
                            rows_tile_cap=None, hw_tile_cap=None):
    """x: (B, C, H, W). Linear weights stored as (in, out). Returns (B, C, 1, 1)."""
    B, C, H, W = x.shape
    Cr = w1.shape[1]
    BC = B * C
    HW = H * W

    x2d = x.reshape(BC, HW)  # contiguous -> free reshape

    rows_tile, hw_tile = _pick_tiles(BC, HW, x.dtype.itemsize,
                                     rows_tile_cap, hw_tile_cap)
    grid = (pl.cdiv(BC, rows_tile), pl.cdiv(HW, hw_tile))

    pooled = pl.pallas_call(
        functools.partial(_pool_mean_kernel,
                          hw_total=HW, hw_tile=hw_tile, inv_hw=1.0 / float(HW)),
        out_shape=jax.ShapeDtypeStruct((BC, 1), jnp.float32),
        grid_spec=pltpu.PrefetchScalarGridSpec(
            num_scalar_prefetch=0,
            grid=grid,
            in_specs=[pl.BlockSpec((rows_tile, hw_tile), lambda i, k: (i, k))],
            out_specs=pl.BlockSpec((rows_tile, 1), lambda i, k: (i, 0)),
        ),
        compiler_params=pltpu.CompilerParams(
            dimension_semantics=("parallel", "arbitrary")),
        cost_estimate=pl.CostEstimate(
            flops=BC * HW,
            transcendentals=0,
            bytes_accessed=BC * HW * x.dtype.itemsize + BC * 4),
    )(x2d)

    y = pooled.reshape(B, C)

    gate = pl.pallas_call(
        functools.partial(_se_mlp_kernel, apply_sigmoid=apply_sigmoid),
        out_shape=jax.ShapeDtypeStruct((B, C), x.dtype),
        in_specs=[
            pl.BlockSpec((B, C), lambda: (0, 0)),
            pl.BlockSpec((C, Cr), lambda: (0, 0)),
            pl.BlockSpec((1, Cr), lambda: (0, 0)),
            pl.BlockSpec((Cr, C), lambda: (0, 0)),
            pl.BlockSpec((1, C), lambda: (0, 0)),
        ],
        out_specs=pl.BlockSpec((B, C), lambda: (0, 0)),
        cost_estimate=pl.CostEstimate(
            flops=2 * B * C * Cr * 2,
            transcendentals=B * C if apply_sigmoid else 0,
            bytes_accessed=(B * C * 4 + C * Cr * 4 * 2 + Cr * 4 + C * 4
                            + B * C * x.dtype.itemsize)),
    )(y, w1, b1.reshape(1, Cr), w2, b2.reshape(1, C))

    return gate.reshape(B, C, 1, 1)


# ---------------------------------------------------------------------------
# Pure-JAX reference
# ---------------------------------------------------------------------------
def _reference(x, w1, b1, w2, b2, apply_sigmoid=True):
    B, C, _, _ = x.shape
    y = jnp.mean(x.astype(jnp.float32), axis=(2, 3))
    h = jnp.maximum(y @ w1 + b1, 0.0)
    z = h @ w2 + b2
    if apply_sigmoid:
        z = jax.nn.sigmoid(z)
    return z.astype(x.dtype).reshape(B, C, 1, 1)


if __name__ == "__main__":
    key = jax.random.PRNGKey(0)

    # --- Test 1: small shapes; single-block fast path, then forced multi-step
    #             (accumulator) path via small tile caps. -------------------
    B, C, H, W = 2, 64, 16, 16
    reduction_ratio = 16
    Cr = C // reduction_ratio  # 4

    kx, kw1, kb1, kw2, kb2 = jax.random.split(key, 5)
    x = jax.random.normal(kx, (B, C, H, W), dtype=jnp.float32)
    w1 = jax.random.normal(kw1, (C, Cr), dtype=jnp.float32) * 0.1
    b1 = jax.random.normal(kb1, (Cr,), dtype=jnp.float32) * 0.1
    w2 = jax.random.normal(kw2, (Cr, C), dtype=jnp.float32) * 0.1
    b2 = jax.random.normal(kb2, (C,), dtype=jnp.float32) * 0.1

    ref = _reference(x, w1, b1, w2, b2, apply_sigmoid=True)

    out = attention_layer_forward(x, w1, b1, w2, b2, apply_sigmoid=True)
    out = jax.block_until_ready(out)
    assert out.shape == (B, C, 1, 1)
    assert jnp.allclose(out, ref, atol=1e-5, rtol=1e-5)

    out_tiled = attention_layer_forward(x, w1, b1, w2, b2, apply_sigmoid=True,
                                        rows_tile_cap=64, hw_tile_cap=128)
    out_tiled = jax.block_until_ready(out_tiled)
    assert jnp.allclose(out_tiled, ref, atol=1e-5, rtol=1e-5)

    # --- Test 2: non-divisible H*W exercises the in-kernel lane mask. ------
    B2, C2, H2, W2 = 2, 32, 15, 15
    Cr2 = C2 // reduction_ratio  # 2
    k2 = jax.random.PRNGKey(1)
    kx2, kw12, kb12, kw22, kb22 = jax.random.split(k2, 5)
    x2 = jax.random.normal(kx2, (B2, C2, H2, W2), dtype=jnp.float32)
    w12 = jax.random.normal(kw12, (C2, Cr2), dtype=jnp.float32) * 0.1
    b12 = jax.random.normal(kb12, (Cr2,), dtype=jnp.float32) * 0.1
    w22 = jax.random.normal(kw22, (Cr2, C2), dtype=jnp.float32) * 0.1
    b22 = jax.random.normal(kb22, (C2,), dtype=jnp.float32) * 0.1

    ref2 = _reference(x2, w12, b12, w22, b22, apply_sigmoid=True)
    out2 = attention_layer_forward(x2, w12, b12, w22, b22, apply_sigmoid=True,
                                   hw_tile_cap=128)  # 225 % 128 != 0 -> mask path
    out2 = jax.block_until_ready(out2)
    assert out2.shape == (B2, C2, 1, 1)
    assert jnp.allclose(out2, ref2, atol=1e-5, rtol=1e-5)

    # --- Test 3: bf16 input exercises dtype-aware tiles + no-sigmoid path. --
    x3 = x.astype(jnp.bfloat16)
    ref3 = _reference(x3, w1, b1, w2, b2, apply_sigmoid=False)
    out3 = attention_layer_forward(x3, w1, b1, w2, b2, apply_sigmoid=False)
    out3 = jax.block_until_ready(out3)
    assert jnp.allclose(out3.astype(jnp.float32), ref3.astype(jnp.float32),
                        atol=2e-2, rtol=2e-2)

    print("KERNEL_OK")
</pallas_src>

<mosaic_0001>
module attributes {stable_mosaic.version = 11 : i64} {
  func.func @_pool_mean_kernel(%arg0: i32, %arg1: i32, %arg2: memref<128x256xf32, #tpu.memory_space<vmem>>, %arg3: memref<128x1xf32, #tpu.memory_space<vmem>>) attributes {dimension_semantics = [#tpu.dimension_semantics<parallel>, #tpu.dimension_semantics<arbitrary>], iteration_bounds = array<i64: 1, 1>, scalar_prefetch = 0 : i64, scratch_operands = 0 : i64, tpu.core_type = #tpu.core_type<tc>, window_params = [{transform_indices = @transform_0, window_bounds = array<i64: 128, 256>}, {transform_indices = @transform_1, window_bounds = array<i64: 128, 1>}]} {
    %c0 = arith.constant 0 : index
    %c0_0 = arith.constant 0 : index
    %0 = vector.load %arg2[%c0, %c0_0] : memref<128x256xf32, #tpu.memory_space<vmem>>, vector<128x256xf32>
    %cst = arith.constant dense<0.000000e+00> : vector<128xf32>
    %1 = vector.multi_reduction <add>, %0, %cst [1] : vector<128x256xf32> to vector<128xf32>
    %2 = vector.shape_cast %1 : vector<128xf32> to vector<128x1xf32>
    %c0_i32 = arith.constant 0 : i32
    %3 = arith.cmpi eq, %arg1, %c0_i32 : i32
    %4 = arith.extui %3 : i1 to i32
    %c0_i32_1 = arith.constant 0 : i32
    %5 = arith.cmpi ne, %4, %c0_i32_1 : i32
    scf.if %5 {
      %cst_8 = arith.constant 0.000000e+00 : f32
      %12 = vector.broadcast %cst_8 : f32 to vector<128x1xf32>
      %c0_9 = arith.constant 0 : index
      %c0_10 = arith.constant 0 : index
      %13 = vector.load %arg3[%c0_9, %c0_10] : memref<128x1xf32, #tpu.memory_space<vmem>>, vector<128x1xf32>
      tpu.vector_store %arg3[%c0_9, %c0_10], %12 {strides = array<i32>} : memref<128x1xf32, #tpu.memory_space<vmem>>, vector<128x1xf32>,
    } else {
    }
    %c0_2 = arith.constant 0 : index
    %c0_3 = arith.constant 0 : index
    %6 = vector.load %arg3[%c0_2, %c0_3] : memref<128x1xf32, #tpu.memory_space<vmem>>, vector<128x1xf32>
    %7 = arith.addf %6, %2 : vector<128x1xf32>
    %c0_4 = arith.constant 0 : index
    %c0_5 = arith.constant 0 : index
    %8 = vector.load %arg3[%c0_4, %c0_5] : memref<128x1xf32, #tpu.memory_space<vmem>>, vector<128x1xf32>
    tpu.vector_store %arg3[%c0_4, %c0_5], %7 {strides = array<i32>} : memref<128x1xf32, #tpu.memory_space<vmem>>, vector<128x1xf32>,
    %c0_i32_6 = arith.constant 0 : i32
    %9 = arith.cmpi eq, %arg1, %c0_i32_6 : i32
    %10 = arith.extui %9 : i1 to i32
    %c0_i32_7 = arith.constant 0 : i32
    %11 = arith.cmpi ne, %10, %c0_i32_7 : i32
    scf.if %11 {
      %c0_8 = arith.constant 0 : index
      %c0_9 = arith.constant 0 : index
      %12 = vector.load %arg3[%c0_8, %c0_9] : memref<128x1xf32, #tpu.memory_space<vmem>>, vector<128x1xf32>
      %cst_10 = arith.constant 3.906250e-03 : f32
      %13 = vector.broadcast %cst_10 : f32 to vector<128x1xf32>
      %14 = arith.mulf %12, %13 : vector<128x1xf32>
      %c0_11 = arith.constant 0 : index
      %c0_12 = arith.constant 0 : index
      %15 = vector.load %arg3[%c0_11, %c0_12] : memref<128x1xf32, #tpu.memory_space<vmem>>, vector<128x1xf32>
      tpu.vector_store %arg3[%c0_11, %c0_12], %14 {strides = array<i32>} : memref<128x1xf32, #tpu.memory_space<vmem>>, vector<128x1xf32>,
    } else {
    }
    return
  }
  func.func @transform_0(%arg0: i32, %arg1: i32) -> (i32, i32) {
    %c0_i32 = arith.constant 0 : i32
    return %arg0, %arg1 : i32, i32
  }
  func.func @transform_1(%arg0: i32, %arg1: i32) -> (i32, i32) {
    %c0_i32 = arith.constant 0 : i32
    %c0_i32_0 = arith.constant 0 : i32
    return %arg0, %c0_i32 : i32, i32
  }
}

</mosaic_0001>

<llo_original>
// kernel: tpu_custom_call.1
$region0: #{tpu_custom_call.1}
  #allocation0 [shape = 'u32[]', space=smem, size = 0x4, offset = 0x4, fixed_abs, tag = 'smem constant byte address 0x4 - core index']
  #allocation1 [shape = 'u32[144,128]{1,0:T(1,128)}', space=vmem, size = 0x12000, scoped, tag = 'internal scratch']
  %s0 = inlined_call_operand.hbm [shape: f32[128,256], index: 0, kind: input, shape index: {}]
  %s1 = inlined_call_operand.vmem [shape: f32[128,1], index: 1, kind: output, shape index: {}]
  %s2 = sld [smem:[#allocation0]]
  $region26: #{tpu_custom_call.1} parent=0
    _
  %s4 = ssub.s32 1, %s2
  %s5 = scalar_select 0, %s4, %s2
  $region1: #{tpu_custom_call.1} parent=0
    #allocation2 [shape = 'u8[131072]{0}', space=vmem, size = 0x20000, scoped, tag = 'input window, operand 0, single buffered']
    #allocation3 [shape = 's32[1]{0}', space=sflag, size = 0x4, scoped, tag = 'scoped memory for tpu_custom_call.1']
    %6 = vsyncpa [#allocation3], 0
    // Predicated region
    $region2: #{tpu_custom_call.1} parent=1 // pred_check
      _
    $region3: #{tpu_custom_call.1} parent=1 // pred_check_branch
      %8 = sbr.rel (0) target = $region5
    $region4: #{tpu_custom_call.1} parent=1 // pred_region
      %s10 = ssub.s32 4096, 4096
      %11 = vsyncadd [#allocation3], %s10
      %s12 = sshll.u32 [#allocation2], 4
      %s13 = int_to_ptr.vmem [resolvable:$true] %s12
      %18 = dma.hbm_to_vmem [thread:$0]  %s0, 4096, %s13, [#allocation3], 256, 256, 16
    $region5: #{tpu_custom_call.1} parent=1 // pred_fallthru
      _
    // Predicated region
    $region6: #{tpu_custom_call.1} parent=1 // pred_check
      _
    $region7: #{tpu_custom_call.1} parent=1 // pred_check_branch
      %20 = sbr.rel (0) target = $region9
    $region8: #{tpu_custom_call.1} parent=1 // pred_region
      %21 = dma.done [#allocation3], 4096
    $region9: #{tpu_custom_call.1} parent=1 // pred_fallthru
      _
    %v22 = vld [vmem:[#allocation2] sm:$0xff]
    %v23 = vld [vmem:[#allocation2 + $0x8] sm:$0xff]
    %v24 = vld [vmem:[#allocation2 + $0x10] sm:$0xff]
    %v25 = vld [vmem:[#allocation2 + $0x18] sm:$0xff]
    %v26 = vld [vmem:[#allocation2 + $0x20] sm:$0xff]
    %v27 = vld [vmem:[#allocation2 + $0x28] sm:$0xff]
    %v28 = vld [vmem:[#allocation2 + $0x30] sm:$0xff]
    %v29 = vld [vmem:[#allocation2 + $0x38] sm:$0xff]
    %v30 = vld [vmem:[#allocation2 + $0x40] sm:$0xff]
    %v31 = vld [vmem:[#allocation2 + $0x48] sm:$0xff]
    %v32 = vld [vmem:[#allocation2 + $0x50] sm:$0xff]
    %v33 = vld [vmem:[#allocation2 + $0x58] sm:$0xff]
    %v34 = vld [vmem:[#allocation2 + $0x60] sm:$0xff]
    %v35 = vld [vmem:[#allocation2 + $0x68] sm:$0xff]
    %v36 = vld [vmem:[#allocation2 + $0x70] sm:$0xff]
    %v37 = vld [vmem:[#allocation2 + $0x78] sm:$0xff]
    %v38 = vld [vmem:[#allocation2 + $0x80] sm:$0xff]
    %v39 = vld [vmem:[#allocation2 + $0x88] sm:$0xff]
    %v40 = vld [vmem:[#allocation2 + $0x90] sm:$0xff]
    %v41 = vld [vmem:[#allocation2 + $0x98] sm:$0xff]
    %v42 = vld [vmem:[#allocation2 + $0xa0] sm:$0xff]
    %v43 = vld [vmem:[#allocation2 + $0xa8] sm:$0xff]
    %v44 = vld [vmem:[#allocation2 + $0xb0] sm:$0xff]
    %v45 = vld [vmem:[#allocation2 + $0xb8] sm:$0xff]
    %v46 = vld [vmem:[#allocation2 + $0xc0] sm:$0xff]
    %v47 = vld [vmem:[#allocation2 + $0xc8] sm:$0xff]
    %v48 = vld [vmem:[#allocation2 + $0xd0] sm:$0xff]
    %v49 = vld [vmem:[#allocation2 + $0xd8] sm:$0xff]
    %v50 = vld [vmem:[#allocation2 + $0xe0] sm:$0xff]
    %v51 = vld [vmem:[#allocation2 + $0xe8] sm:$0xff]
    %v52 = vld [vmem:[#allocation2 + $0xf0] sm:$0xff]
    %v53 = vld [vmem:[#allocation2 + $0xf8] sm:$0xff]
    %v54 = vadd.f32 %v22, %v23
    %55 = vadd.xlane.f32.xlu0 %v54
    %v56 = vpop.xlane.xlu0 %55
    %v57 = vadd.f32 %v24, %v25
    %58 = vadd.xlane.f32.xlu0 %v57
    %v59 = vpop.xlane.xlu0 %58
    %v60 = vadd.f32 %v26, %v27
    %61 = vadd.xlane.f32.xlu0 %v60
    %v62 = vpop.xlane.xlu0 %61
    %v63 = vadd.f32 %v28, %v29
    %64 = vadd.xlane.f32.xlu0 %v63
    %v65 = vpop.xlane.xlu0 %64
    %v66 = vadd.f32 %v30, %v31
    %67 = vadd.xlane.f32.xlu0 %v66
    %v68 = vpop.xlane.xlu0 %67
    %v69 = vadd.f32 %v32, %v33
    %70 = vadd.xlane.f32.xlu0 %v69
    %v71 = vpop.xlane.xlu0 %70
    %v72 = vadd.f32 %v34, %v35
    %73 = vadd.xlane.f32.xlu0 %v72
    %v74 = vpop.xlane.xlu0 %73
    %v75 = vadd.f32 %v36, %v37
    %76 = vadd.xlane.f32.xlu0 %v75
    %v77 = vpop.xlane.xlu0 %76
    %v78 = vadd.f32 %v38, %v39
    %79 = vadd.xlane.f32.xlu0 %v78
    %v80 = vpop.xlane.xlu0 %79
    %v81 = vadd.f32 %v40, %v41
    %82 = vadd.xlane.f32.xlu0 %v81
    %v83 = vpop.xlane.xlu0 %82
    %v84 = vadd.f32 %v42, %v43
    %85 = vadd.xlane.f32.xlu0 %v84
    %v86 = vpop.xlane.xlu0 %85
    %v87 = vadd.f32 %v44, %v45
    %88 = vadd.xlane.f32.xlu0 %v87
    %v89 = vpop.xlane.xlu0 %88
    %v90 = vadd.f32 %v46, %v47
    %91 = vadd.xlane.f32.xlu0 %v90
    %v92 = vpop.xlane.xlu0 %91
    %v93 = vadd.f32 %v48, %v49
    %94 = vadd.xlane.f32.xlu0 %v93
    %v95 = vpop.xlane.xlu0 %94
    %v96 = vadd.f32 %v50, %v51
    %97 = vadd.xlane.f32.xlu0 %v96
    %v98 = vpop.xlane.xlu0 %97
    %v99 = vadd.f32 %v52, %v53
    %100 = vadd.xlane.f32.xlu0 %v99
    %v101 = vpop.xlane.xlu0 %100
    %p102 = scmp.eq.s32.totalorder 0, 0
    // Predicated region
    $region10: #{tpu_custom_call.1} parent=1 // pred_check
      %p103 = pneg %p102
    $region11: #{tpu_custom_call.1} parent=1 // pred_check_branch
      %105 = sbr.rel (%p103) target = $region13
    $region12: #{tpu_custom_call.1} parent=1 // pred_region
      %vm106 = vcmask 7168
      %107 = vst.msk [vmem:[%s1] sm:$0xff] %vm106, 0.0
      %108 = vst.msk [vmem:[%s1 + $0x8] sm:$0xff] %vm106, 0.0
      %109 = vst.msk [vmem:[%s1 + $0x10] sm:$0xff] %vm106, 0.0
      %110 = vst.msk [vmem:[%s1 + $0x18] sm:$0xff] %vm106, 0.0
      %111 = vst.msk [vmem:[%s1 + $0x20] sm:$0xff] %vm106, 0.0
      %112 = vst.msk [vmem:[%s1 + $0x28] sm:$0xff] %vm106, 0.0
      %113 = vst.msk [vmem:[%s1 + $0x30] sm:$0xff] %vm106, 0.0
      %114 = vst.msk [vmem:[%s1 + $0x38] sm:$0xff] %vm106, 0.0
      %115 = vst.msk [vmem:[%s1 + $0x40] sm:$0xff] %vm106, 0.0
      %116 = vst.msk [vmem:[%s1 + $0x48] sm:$0xff] %vm106, 0.0
      %117 = vst.msk [vmem:[%s1 + $0x50] sm:$0xff] %vm106, 0.0
      %118 = vst.msk [vmem:[%s1 + $0x58] sm:$0xff] %vm106, 0.0
      %119 = vst.msk [vmem:[%s1 + $0x60] sm:$0xff] %vm106, 0.0
      %120 = vst.msk [vmem:[%s1 + $0x68] sm:$0xff] %vm106, 0.0
      %121 = vst.msk [vmem:[%s1 + $0x70] sm:$0xff] %vm106, 0.0
      %122 = vst.msk [vmem:[%s1 + $0x78] sm:$0xff] %vm106, 0.0
    $region13: #{tpu_custom_call.1} parent=1 // pred_fallthru
      _
    %v123 = vld [vmem:[%s1] sm:$0xff]
    %v124 = vld [vmem:[%s1 + $0x8] sm:$0xff]
    %v125 = vld [vmem:[%s1 + $0x10] sm:$0xff]
    %v126 = vld [vmem:[%s1 + $0x18] sm:$0xff]
    %v127 = vld [vmem:[%s1 + $0x20] sm:$0xff]
    %v128 = vld [vmem:[%s1 + $0x28] sm:$0xff]
    %v129 = vld [vmem:[%s1 + $0x30] sm:$0xff]
    %v130 = vld [vmem:[%s1 + $0x38] sm:$0xff]
    %v131 = vld [vmem:[%s1 + $0x40] sm:$0xff]
    %v132 = vld [vmem:[%s1 + $0x48] sm:$0xff]
    %v133 = vld [vmem:[%s1 + $0x50] sm:$0xff]
    %v134 = vld [vmem:[%s1 + $0x58] sm:$0xff]
    %v135 = vld [vmem:[%s1 + $0x60] sm:$0xff]
    %v136 = vld [vmem:[%s1 + $0x68] sm:$0xff]
    %v137 = vld [vmem:[%s1 + $0x70] sm:$0xff]
    %v138 = vld [vmem:[%s1 + $0x78] sm:$0xff]
    %v139 = vadd.f32 %v123, %v56
    %v140 = vadd.f32 %v124, %v59
    %v141 = vadd.f32 %v125, %v62
    %v142 = vadd.f32 %v126, %v65
    %v143 = vadd.f32 %v127, %v68
    %v144 = vadd.f32 %v128, %v71
    %v145 = vadd.f32 %v129, %v74
    %v146 = vadd.f32 %v130, %v77
    %v147 = vadd.f32 %v131, %v80
    %v148 = vadd.f32 %v132, %v83
    %v149 = vadd.f32 %v133, %v86
    %v150 = vadd.f32 %v134, %v89
    %v151 = vadd.f32 %v135, %v92
    %v152 = vadd.f32 %v136, %v95
    %v153 = vadd.f32 %v137, %v98
    %v154 = vadd.f32 %v138, %v101
    %vm155 = vcmask 7168
    %156 = vst.msk [vmem:[%s1] sm:$0xff] %vm155, %v139
    %157 = vst.msk [vmem:[%s1 + $0x8] sm:$0xff] %vm155, %v140
    %158 = vst.msk [vmem:[%s1 + $0x10] sm:$0xff] %vm155, %v141
    %159 = vst.msk [vmem:[%s1 + $0x18] sm:$0xff] %vm155, %v142
    %160 = vst.msk [vmem:[%s1 + $0x20] sm:$0xff] %vm155, %v143
    %161 = vst.msk [vmem:[%s1 + $0x28] sm:$0xff] %vm155, %v144
    %162 = vst.msk [vmem:[%s1 + $0x30] sm:$0xff] %vm155, %v145
    %163 = vst.msk [vmem:[%s1 + $0x38] sm:$0xff] %vm155, %v146
    %164 = vst.msk [vmem:[%s1 + $0x40] sm:$0xff] %vm155, %v147
    %165 = vst.msk [vmem:[%s1 + $0x48] sm:$0xff] %vm155, %v148
    %166 = vst.msk [vmem:[%s1 + $0x50] sm:$0xff] %vm155, %v149
    %167 = vst.msk [vmem:[%s1 + $0x58] sm:$0xff] %vm155, %v150
    %168 = vst.msk [vmem:[%s1 + $0x60] sm:$0xff] %vm155, %v151
    %169 = vst.msk [vmem:[%s1 + $0x68] sm:$0xff] %vm155, %v152
    %170 = vst.msk [vmem:[%s1 + $0x70] sm:$0xff] %vm155, %v153
    %171 = vst.msk [vmem:[%s1 + $0x78] sm:$0xff] %vm155, %v154
    // Predicated region
    $region14: #{tpu_custom_call.1} parent=1 // pred_check
      %p172 = pneg %p102
    $region15: #{tpu_custom_call.1} parent=1 // pred_check_branch
      %174 = sbr.rel (%p172) target = $region17
    $region16: #{tpu_custom_call.1} parent=1 // pred_region
      %v175 = vld [vmem:[%s1] sm:$0xff]
      %v176 = vld [vmem:[%s1 + $0x8] sm:$0xff]
      %v177 = vld [vmem:[%s1 + $0x10] sm:$0xff]
      %v178 = vld [vmem:[%s1 + $0x18] sm:$0xff]
      %v179 = vld [vmem:[%s1 + $0x20] sm:$0xff]
      %v180 = vld [vmem:[%s1 + $0x28] sm:$0xff]
      %v181 = vld [vmem:[%s1 + $0x30] sm:$0xff]
      %v182 = vld [vmem:[%s1 + $0x38] sm:$0xff]
      %v183 = vld [vmem:[%s1 + $0x40] sm:$0xff]
      %v184 = vld [vmem:[%s1 + $0x48] sm:$0xff]
      %v185 = vld [vmem:[%s1 + $0x50] sm:$0xff]
      %v186 = vld [vmem:[%s1 + $0x58] sm:$0xff]
      %v187 = vld [vmem:[%s1 + $0x60] sm:$0xff]
      %v188 = vld [vmem:[%s1 + $0x68] sm:$0xff]
      %v189 = vld [vmem:[%s1 + $0x70] sm:$0xff]
      %v190 = vld [vmem:[%s1 + $0x78] sm:$0xff]
      %v191 = vmul.f32 %v175, 0.00390625
      %v192 = vmul.f32 %v176, 0.00390625
      %v193 = vmul.f32 %v177, 0.00390625
      %v194 = vmul.f32 %v178, 0.00390625
      %v195 = vmul.f32 %v179, 0.00390625
      %v196 = vmul.f32 %v180, 0.00390625
      %v197 = vmul.f32 %v181, 0.00390625
      %v198 = vmul.f32 %v182, 0.00390625
      %v199 = vmul.f32 %v183, 0.00390625
      %v200 = vmul.f32 %v184, 0.00390625
      %v201 = vmul.f32 %v185, 0.00390625
      %v202 = vmul.f32 %v186, 0.00390625
      %v203 = vmul.f32 %v187, 0.00390625
      %v204 = vmul.f32 %v188, 0.00390625
      %v205 = vmul.f32 %v189, 0.00390625
      %v206 = vmul.f32 %v190, 0.00390625
      %207 = vst.msk [vmem:[%s1] sm:$0xff] %vm155, %v191
      %208 = vst.msk [vmem:[%s1 + $0x8] sm:$0xff] %vm155, %v192
      %209 = vst.msk [vmem:[%s1 + $0x10] sm:$0xff] %vm155, %v193
      %210 = vst.msk [vmem:[%s1 + $0x18] sm:$0xff] %vm155, %v194
      %211 = vst.msk [vmem:[%s1 + $0x20] sm:$0xff] %vm155, %v195
      %212 = vst.msk [vmem:[%s1 + $0x28] sm:$0xff] %vm155, %v196
      %213 = vst.msk [vmem:[%s1 + $0x30] sm:$0xff] %vm155, %v197
      %214 = vst.msk [vmem:[%s1 + $0x38] sm:$0xff] %vm155, %v198
      %215 = vst.msk [vmem:[%s1 + $0x40] sm:$0xff] %vm155, %v199
      %216 = vst.msk [vmem:[%s1 + $0x48] sm:$0xff] %vm155, %v200
      %217 = vst.msk [vmem:[%s1 + $0x50] sm:$0xff] %vm155, %v201
      %218 = vst.msk [vmem:[%s1 + $0x58] sm:$0xff] %vm155, %v202
      %219 = vst.msk [vmem:[%s1 + $0x60] sm:$0xff] %vm155, %v203
      %220 = vst.msk [vmem:[%s1 + $0x68] sm:$0xff] %vm155, %v204
      %221 = vst.msk [vmem:[%s1 + $0x70] sm:$0xff] %vm155, %v205
      %222 = vst.msk [vmem:[%s1 + $0x78] sm:$0xff] %vm155, %v206
    $region17: #{tpu_custom_call.1} parent=1 // pred_fallthru
      _
    // Predicated region
    $region18: #{tpu_custom_call.1} parent=1 // pred_check
      _
    $region19: #{tpu_custom_call.1} parent=1 // pred_check_branch
      %224 = sbr.rel (0) target = $region21
    $region20: #{tpu_custom_call.1} parent=1 // pred_region
      _
    $region21: #{tpu_custom_call.1} parent=1 // pred_fallthru
      _
    // Predicated region
    $region22: #{tpu_custom_call.1} parent=1 // pred_check
      _
    $region23: #{tpu_custom_call.1} parent=1 // pred_check_branch
      %226 = sbr.rel (0) target = $region25
    $region24: #{tpu_custom_call.1} parent=1 // pred_region
      _
    $region25: #{tpu_custom_call.1} parent=1 // pred_fallthru
      _
    %227 = vsyncpa [#allocation3], 1

</llo_original>
